<compile_context>
chip_gen: v5e
topology: v5e:2x2
jax: 0.10.0
libtpu: 0.0.40
codegen_flags: <defaults>
</compile_context>

<pallas_src>
import functools

import jax
import jax.numpy as jnp
from jax.experimental import pallas as pl
from jax.experimental.pallas import tpu as pltpu


def _ru8(x):
    return (x + 7) // 8 * 8


def _att_offsets(Dc, R):
    """Sublane(8)-aligned row offsets inside the attention weight slab."""
    o_ctx = 0
    o_h = _ru8(Dc)
    o_b = o_h + _ru8(R)
    o_alpha = o_b + 8
    rows = o_alpha + 8
    return o_ctx, o_h, o_b, o_alpha, rows


# ----------------------------- Pallas kernel ------------------------------ #
def three_stream_kernel(s0_ref, x1h_ref, s2_ref, clipf_ref, mask_ref, c_ref,
                        attw_ref, w0_ref, w1_ref, w2_ref, bias_ref,
                        balpha_ref, out_ref, *, E, Dc, S, R, H):
    f32 = jnp.float32
    B = s0_ref.shape[0]
    o_ctx, o_h, o_b, o_alpha, _ = _att_offsets(Dc, R)

    # ------------------------------ attention ----------------------------- #
    h1_prev = x1h_ref[:, E:E + R]                       # pre_h1 = h[1]
    wctx = attw_ref[o_ctx:o_ctx + Dc, :]                # (Dc, H)
    wh2a = attw_ref[o_h:o_h + R, :]                     # (R, H)
    b_att = attw_ref[o_b:o_b + 1, :]                    # (1, H) = bctx + bh2a
    walpha = attw_ref[o_alpha:o_alpha + 1, :]           # (1, H)

    clipf = clipf_ref[...]                                              # (B*S,Dc)
    att = jnp.dot(clipf, wctx, preferred_element_type=f32)              # (B*S,H)
    att_h = jnp.dot(h1_prev, wh2a, preferred_element_type=f32) + b_att  # (B,H)
    dot = jnp.tanh(att.reshape(B, S, H) + att_h[:, None, :])            # (B,S,H)
    # alpha_net as VPU multiply + XLU lane reduce (avoids an N=1 MXU matmul).
    score = jnp.sum(dot * walpha[None, :, :], axis=-1) + balpha_ref[0]  # (B,S)

    # softmax -> mask -> renormalize, with the redundant first normalisation
    # dropped: exp*mask / sum(exp*mask) == (softmax*mask) renormalised.
    score = score - jnp.max(score, axis=-1, keepdims=True)
    w = jnp.exp(score) * mask_ref[...]
    w = w * pl.reciprocal(jnp.sum(w, axis=-1, keepdims=True), approx=True)
    att_res = jnp.sum(w[:, :, None] * clipf.reshape(B, S, Dc), axis=1)  # (B,Dc)

    # ------------------------------ LSTM cells ---------------------------- #
    def cell(gates, c_prev):
        i = jax.nn.sigmoid(gates[:, 0 * R:1 * R])
        f = jax.nn.sigmoid(gates[:, 1 * R:2 * R])
        g = jnp.tanh(gates[:, 2 * R:3 * R])
        o = jax.nn.sigmoid(gates[:, 3 * R:4 * R])
        c_new = f * c_prev + i * g
        return o * jnp.tanh(c_new), c_new

    # One fused (K, 4R) matmul per stream; stream-1 appends att_res at the end
    # (w1 rows pre-reordered as [xt | h | att] to match).
    s1 = jnp.concatenate([x1h_ref[...], att_res], axis=1)

    g0 = jnp.dot(s0_ref[...], w0_ref[...], preferred_element_type=f32) + bias_ref[0:1, :]
    g1 = jnp.dot(s1, w1_ref[...], preferred_element_type=f32) + bias_ref[1:2, :]
    g2 = jnp.dot(s2_ref[...], w2_ref[...], preferred_element_type=f32) + bias_ref[2:3, :]

    h0, c0 = cell(g0, c_ref[0])
    h1, c1 = cell(g1, c_ref[1])
    h2, c2 = cell(g2, c_ref[2])

    # dropout0/1/2 identity (eval).  Single lane-dense (B, 6R) store.
    out_ref[...] = jnp.concatenate([h0, h1, h2, c0, c1, c2], axis=1)


# ------------------------------- wrapper ----------------------------------- #
def three_stream_core(xt, video, event, clip, clip_mask, state, params):
    """xt (B,E), video (Dv,), event (B,De), clip (B,S,Dc), clip_mask (B,S),
    state = (h_stack (3,B,R), c_stack (3,B,R)).  Returns (out (B,3R), state)."""
    h_stack, c_stack = state
    B, E = xt.shape
    Dv = video.shape[0]
    S, Dc = clip.shape[1], clip.shape[2]
    R = h_stack.shape[2]
    H = params["attw"].shape[1]
    f32 = jnp.float32

    video_b = jnp.broadcast_to(video[None, :].astype(f32), (B, Dv))
    # Per-stream lane-dense input slabs, h_prev already appended.
    s0 = jnp.concatenate([xt, event, h_stack[0]], axis=1)      # (B, E+De+R)
    x1h = jnp.concatenate([xt, h_stack[1]], axis=1)            # (B, E+R)
    s2 = jnp.concatenate([xt, video_b, h_stack[2]], axis=1)    # (B, E+Dv+R)
    clip_flat = clip.reshape(B * S, Dc)

    kernel = functools.partial(three_stream_kernel, E=E, Dc=Dc, S=S, R=R, H=H)

    vmem = pl.BlockSpec(memory_space=pltpu.MemorySpace.VMEM)
    smem = pl.BlockSpec(memory_space=pltpu.MemorySpace.SMEM)
    hc_out = pl.pallas_call(
        kernel,
        out_shape=jax.ShapeDtypeStruct((B, 6 * R), f32),
        in_specs=[vmem] * 11 + [smem],
        out_specs=vmem,
    )(s0, x1h, s2, clip_flat, clip_mask, c_stack,
      params["attw"], params["w0"], params["w1"], params["w2"],
      params["bias"], params["balpha"])

    out = hc_out[:, :3 * R]
    h_new = out.reshape(B, 3, R).transpose(1, 0, 2)
    c_new = hc_out[:, 3 * R:].reshape(B, 3, R).transpose(1, 0, 2)
    return out, (h_new, c_new)


# --------------------------- param construction ---------------------------- #
def make_raw_params(key, E, R, H, Dc, De, Dv):
    """PyTorch-layout parameters (nn.Linear / nn.LSTMCell conventions)."""
    ks = iter(jax.random.split(key, 32))

    def uni(shape, bound):
        return jax.random.uniform(next(ks), shape, jnp.float32, -bound, bound)

    p = {}
    k = 1.0 / float(Dc) ** 0.5
    p["wctx"], p["bctx"] = uni((H, Dc), k), uni((H,), k)
    k = 1.0 / float(R) ** 0.5
    p["wh2a"], p["bh2a"] = uni((H, R), k), uni((H,), k)
    k = 1.0 / float(H) ** 0.5
    p["walpha"], p["balpha"] = uni((1, H), k), uni((1,), k)

    for idx, extra in ((0, De), (1, Dc), (2, Dv)):
        k = 1.0 / float(R) ** 0.5
        p[f"w_ih{idx}"] = uni((4 * R, E + extra), k)
        p[f"w_hh{idx}"] = uni((4 * R, R), k)
        p[f"b_ih{idx}"] = uni((4 * R,), k)
        p[f"b_hh{idx}"] = uni((4 * R,), k)
    return p


def pack_params(raw):
    """Pack raw PyTorch-layout params into the kernel's fused slabs."""
    Dc = raw["wctx"].shape[1]
    R = raw["wh2a"].shape[1]
    H = raw["wctx"].shape[0]
    E = raw["w_ih1"].shape[1] - Dc
    o_ctx, o_h, o_b, o_alpha, rows = _att_offsets(Dc, R)

    attw = jnp.zeros((rows, H), jnp.float32)
    attw = attw.at[o_ctx:o_ctx + Dc, :].set(raw["wctx"].T)
    attw = attw.at[o_h:o_h + R, :].set(raw["wh2a"].T)
    attw = attw.at[o_b, :].set(raw["bctx"] + raw["bh2a"])
    attw = attw.at[o_alpha, :].set(raw["walpha"][0])

    packed = {
        "attw": attw,                                               # aligned slab
        "balpha": raw["balpha"],                                    # (1,) SMEM
        "bias": jnp.stack(
            [raw[f"b_ih{i}"] + raw[f"b_hh{i}"] for i in range(3)]), # (3, 4R)
        # stream 0: input = cat(xt, event, h0)
        "w0": jnp.concatenate([raw["w_ih0"].T, raw["w_hh0"].T], axis=0),
        # stream 1: input = cat(xt, h1, att_res)  (rows reordered)
        "w1": jnp.concatenate([raw["w_ih1"][:, :E].T, raw["w_hh1"].T,
                               raw["w_ih1"][:, E:].T], axis=0),
        # stream 2: input = cat(xt, video, h2)
        "w2": jnp.concatenate([raw["w_ih2"].T, raw["w_hh2"].T], axis=0),
    }
    return packed


# ------------------------- pure-JAX reference ------------------------------ #
def reference_forward(xt, video, event, clip, clip_mask, state, raw):
    """Mirrors the PyTorch ThreeStream_Core.forward (eval mode)."""
    hp = jax.lax.Precision.HIGHEST
    h_stack, c_stack = state
    B = xt.shape[0]
    S, Dc = clip.shape[1], clip.shape[2]
    R = h_stack.shape[2]

    def linear(x, w, b):
        return jnp.dot(x, w.T, precision=hp) + b

    def lstm_cell(x, h, c, i):
        g = (jnp.dot(x, raw[f"w_ih{i}"].T, precision=hp) + raw[f"b_ih{i}"]
             + jnp.dot(h, raw[f"w_hh{i}"].T, precision=hp) + raw[f"b_hh{i}"])
        ig = jax.nn.sigmoid(g[:, :R])
        fg = jax.nn.sigmoid(g[:, R:2 * R])
        gg = jnp.tanh(g[:, 2 * R:3 * R])
        og = jax.nn.sigmoid(g[:, 3 * R:])
        c_new = fg * c + ig * gg
        return og * jnp.tanh(c_new), c_new

    pre_h1 = h_stack[1]
    video_b = jnp.broadcast_to(video[None, :], (B, video.shape[0]))

    att = linear(clip.reshape(-1, Dc), raw["wctx"], raw["bctx"]).reshape(B, S, -1)
    att_h = linear(pre_h1, raw["wh2a"], raw["bh2a"])
    dot = jnp.tanh(att + att_h[:, None, :])
    score = linear(dot.reshape(-1, dot.shape[-1]),
                   raw["walpha"], raw["balpha"]).reshape(B, S)
    w = jax.nn.softmax(score, axis=-1)
    w = w * clip_mask
    w = w / w.sum(1, keepdims=True)
    att_res = jnp.einsum("bs,bsd->bd", w, clip, precision=hp)

    h0, c0 = lstm_cell(jnp.concatenate([xt, event], 1), h_stack[0], c_stack[0], 0)
    h1, c1 = lstm_cell(jnp.concatenate([xt, att_res], 1), h_stack[1], c_stack[1], 1)
    h2, c2 = lstm_cell(jnp.concatenate([xt, video_b], 1), h_stack[2], c_stack[2], 2)
    out = jnp.concatenate([h0, h1, h2], axis=1)
    return out, (jnp.stack([h0, h1, h2]), jnp.stack([c0, c1, c2]))


if __name__ == "__main__":
    # small shapes consistent with the module
    B = 4          # batch
    E = 16         # CG_input_encoding_size
    R = 32         # CG_rnn_size
    H = 32         # CG_att_hid_size
    Dc = 16        # clip_context_dim
    De = 16        # event_context_dim
    Dv = 16        # video_context_dim
    S = 8          # att_size (number of clip features)

    key = jax.random.PRNGKey(0)
    kin, kpar = jax.random.split(key)
    k = iter(jax.random.split(kin, 16))

    xt = jax.random.normal(next(k), (B, E), jnp.float32)
    video = jax.random.normal(next(k), (Dv,), jnp.float32)
    event = jax.random.normal(next(k), (B, De), jnp.float32)
    clip = jax.random.normal(next(k), (B, S, Dc), jnp.float32)
    clip_mask = (jax.random.uniform(next(k), (B, S)) > 0.3).astype(jnp.float32)
    clip_mask = clip_mask.at[:, 0].set(1.0)   # ensure no all-zero mask rows
    h_stack = 0.1 * jax.random.normal(next(k), (3, B, R), jnp.float32)
    c_stack = 0.1 * jax.random.normal(next(k), (3, B, R), jnp.float32)

    raw = make_raw_params(kpar, E, R, H, Dc, De, Dv)
    params = pack_params(raw)

    out, (h_out, c_out) = three_stream_core(
        xt, video, event, clip, clip_mask, (h_stack, c_stack), params)
    jax.block_until_ready((out, h_out, c_out))

    assert out.shape == (B, 3 * R)
    assert h_out.shape == (3, B, R) and c_out.shape == (3, B, R)
    assert bool(jnp.all(jnp.isfinite(out)))

    # correctness vs a pure-JAX mirror of the PyTorch forward
    ref_out, (ref_h, ref_c) = reference_forward(
        xt, video, event, clip, clip_mask, (h_stack, c_stack), raw)
    assert float(jnp.max(jnp.abs(out - ref_out))) < 1e-2
    assert float(jnp.max(jnp.abs(h_out - ref_h))) < 1e-2
    assert float(jnp.max(jnp.abs(c_out - ref_c))) < 1e-2

    print("KERNEL_OK")
</pallas_src>

<mosaic_0001>
module attributes {stable_mosaic.version = 11 : i64} {
  func.func @three_stream_kernel(%arg0: memref<4x64xf32, #tpu.memory_space<vmem>>, %arg1: memref<4x48xf32, #tpu.memory_space<vmem>>, %arg2: memref<4x64xf32, #tpu.memory_space<vmem>>, %arg3: memref<32x16xf32, #tpu.memory_space<vmem>>, %arg4: memref<4x8xf32, #tpu.memory_space<vmem>>, %arg5: memref<3x4x32xf32, #tpu.memory_space<vmem>>, %arg6: memref<64x32xf32, #tpu.memory_space<vmem>>, %arg7: memref<64x128xf32, #tpu.memory_space<vmem>>, %arg8: memref<64x128xf32, #tpu.memory_space<vmem>>, %arg9: memref<64x128xf32, #tpu.memory_space<vmem>>, %arg10: memref<3x128xf32, #tpu.memory_space<vmem>>, %arg11: memref<1xf32, #tpu.memory_space<smem>>, %arg12: memref<4x192xf32, #tpu.memory_space<vmem>>) attributes {dimension_semantics = [], scalar_prefetch = 0 : i64, scratch_operands = 0 : i64, tpu.core_type = #tpu.core_type<tc>} {
    %c0 = arith.constant 0 : index
    %c16 = arith.constant 16 : index
    %0 = vector.load %arg1[%c0, %c16] : memref<4x48xf32, #tpu.memory_space<vmem>>, vector<4x32xf32>
    %c0_0 = arith.constant 0 : index
    %c0_1 = arith.constant 0 : index
    %1 = vector.load %arg6[%c0_0, %c0_1] : memref<64x32xf32, #tpu.memory_space<vmem>>, vector<16x32xf32>
    %c16_2 = arith.constant 16 : index
    %c0_3 = arith.constant 0 : index
    %2 = vector.load %arg6[%c16_2, %c0_3] : memref<64x32xf32, #tpu.memory_space<vmem>>, vector<32x32xf32>
    %c48 = arith.constant 48 : index
    %c0_4 = arith.constant 0 : index
    %3 = vector.load %arg6[%c48, %c0_4] : memref<64x32xf32, #tpu.memory_space<vmem>>, vector<1x32xf32>
    %c56 = arith.constant 56 : index
    %c0_5 = arith.constant 0 : index
    %4 = vector.load %arg6[%c56, %c0_5] : memref<64x32xf32, #tpu.memory_space<vmem>>, vector<1x32xf32>
    %c0_6 = arith.constant 0 : index
    %c0_7 = arith.constant 0 : index
    %5 = vector.load %arg3[%c0_6, %c0_7] : memref<32x16xf32, #tpu.memory_space<vmem>>, vector<32x16xf32>
    %cst = arith.constant dense<0.000000e+00> : vector<32x32xf32>
    %6 = tpu.matmul %5, %1, %cst {dimension_numbers = #tpu.dot_dimension_numbers<[1], [0], [0], [1], [0, 0, 1, 1], [], []>} : vector<32x16xf32>, vector<16x32xf32>, vector<32x32xf32> -> vector<32x32xf32>
    %cst_8 = arith.constant dense<0.000000e+00> : vector<4x32xf32>
    %7 = tpu.matmul %0, %2, %cst_8 {dimension_numbers = #tpu.dot_dimension_numbers<[1], [0], [0], [1], [0, 0, 1, 1], [], []>} : vector<4x32xf32>, vector<32x32xf32>, vector<4x32xf32> -> vector<4x32xf32>
    %8 = vector.broadcast %3 : vector<1x32xf32> to vector<4x32xf32>
    %9 = arith.addf %7, %8 : vector<4x32xf32>
    %10 = vector.shape_cast %6 : vector<32x32xf32> to vector<4x8x32xf32>
    %11 = vector.shape_cast %9 : vector<4x32xf32> to vector<4x1x32xf32>
    %12 = vector.broadcast %11 : vector<4x1x32xf32> to vector<4x8x32xf32>
    %13 = arith.addf %10, %12 : vector<4x8x32xf32>
    %14 = math.tanh %13 : vector<4x8x32xf32>
    %15 = vector.shape_cast %4 : vector<1x32xf32> to vector<1x1x32xf32>
    %16 = vector.broadcast %15 : vector<1x1x32xf32> to vector<4x8x32xf32>
    %17 = arith.mulf %14, %16 : vector<4x8x32xf32>
    %cst_9 = arith.constant dense<0.000000e+00> : vector<4x8xf32>
    %18 = vector.multi_reduction <add>, %17, %cst_9 [2] : vector<4x8x32xf32> to vector<4x8xf32>
    %c0_10 = arith.constant 0 : index
    %19 = memref.load %arg11[%c0_10] : memref<1xf32, #tpu.memory_space<smem>>
    %20 = vector.broadcast %19 : f32 to vector<4x8xf32>
    %21 = arith.addf %18, %20 : vector<4x8xf32>
    %cst_11 = arith.constant dense<0xFF800000> : vector<4xf32>
    %22 = vector.multi_reduction <maximumf>, %21, %cst_11 [1] : vector<4x8xf32> to vector<4xf32>
    %23 = vector.shape_cast %22 : vector<4xf32> to vector<4x1xf32>
    %24 = vector.broadcast %23 : vector<4x1xf32> to vector<4x8xf32>
    %25 = arith.subf %21, %24 : vector<4x8xf32>
    %26 = math.exp %25 : vector<4x8xf32>
    %c0_12 = arith.constant 0 : index
    %c0_13 = arith.constant 0 : index
    %27 = vector.load %arg4[%c0_12, %c0_13] : memref<4x8xf32, #tpu.memory_space<vmem>>, vector<4x8xf32>
    %28 = arith.mulf %26, %27 : vector<4x8xf32>
    %cst_14 = arith.constant dense<0.000000e+00> : vector<4xf32>
    %29 = vector.multi_reduction <add>, %28, %cst_14 [1] : vector<4x8xf32> to vector<4xf32>
    %30 = vector.shape_cast %29 : vector<4xf32> to vector<4x1xf32>
    %31 = tpu.reciprocal %30 {approx = true} : vector<4x1xf32> -> vector<4x1xf32>
    %32 = vector.broadcast %31 : vector<4x1xf32> to vector<4x8xf32>
    %33 = arith.mulf %28, %32 : vector<4x8xf32>
    %34 = vector.shape_cast %33 : vector<4x8xf32> to vector<4x8x1xf32>
    %35 = vector.shape_cast %5 : vector<32x16xf32> to vector<4x8x16xf32>
    %36 = vector.broadcast %34 : vector<4x8x1xf32> to vector<4x8x16xf32>
    %37 = arith.mulf %36, %35 : vector<4x8x16xf32>
    %cst_15 = arith.constant dense<0.000000e+00> : vector<4x16xf32>
    %38 = vector.multi_reduction <add>, %37, %cst_15 [1] : vector<4x8x16xf32> to vector<4x16xf32>
    %c0_16 = arith.constant 0 : index
    %c0_17 = arith.constant 0 : index
    %39 = vector.load %arg1[%c0_16, %c0_17] : memref<4x48xf32, #tpu.memory_space<vmem>>, vector<4x48xf32>
    %40 = tpu.concatenate %39, %38 in 1 : vector<4x48xf32>, vector<4x16xf32> -> vector<4x64xf32>
    %c0_18 = arith.constant 0 : index
    %c0_19 = arith.constant 0 : index
    %41 = vector.load %arg0[%c0_18, %c0_19] : memref<4x64xf32, #tpu.memory_space<vmem>>, vector<4x64xf32>
    %c0_20 = arith.constant 0 : index
    %c0_21 = arith.constant 0 : index
    %42 = vector.load %arg7[%c0_20, %c0_21] : memref<64x128xf32, #tpu.memory_space<vmem>>, vector<64x128xf32>
    %cst_22 = arith.constant dense<0.000000e+00> : vector<4x128xf32>
    %43 = tpu.matmul %41, %42, %cst_22 {dimension_numbers = #tpu.dot_dimension_numbers<[1], [0], [0], [1], [0, 0, 1, 1], [], []>} : vector<4x64xf32>, vector<64x128xf32>, vector<4x128xf32> -> vector<4x128xf32>
    %c0_23 = arith.constant 0 : index
    %c0_24 = arith.constant 0 : index
    %44 = vector.load %arg10[%c0_23, %c0_24] : memref<3x128xf32, #tpu.memory_space<vmem>>, vector<1x128xf32>
    %45 = vector.broadcast %44 : vector<1x128xf32> to vector<4x128xf32>
    %46 = arith.addf %43, %45 : vector<4x128xf32>
    %c0_25 = arith.constant 0 : index
    %c0_26 = arith.constant 0 : index
    %47 = vector.load %arg8[%c0_25, %c0_26] : memref<64x128xf32, #tpu.memory_space<vmem>>, vector<64x128xf32>
    %cst_27 = arith.constant dense<0.000000e+00> : vector<4x128xf32>
    %48 = tpu.matmul %40, %47, %cst_27 {dimension_numbers = #tpu.dot_dimension_numbers<[1], [0], [0], [1], [0, 0, 1, 1], [], []>} : vector<4x64xf32>, vector<64x128xf32>, vector<4x128xf32> -> vector<4x128xf32>
    %c1 = arith.constant 1 : index
    %c0_28 = arith.constant 0 : index
    %49 = vector.load %arg10[%c1, %c0_28] : memref<3x128xf32, #tpu.memory_space<vmem>>, vector<1x128xf32>
    %50 = vector.broadcast %49 : vector<1x128xf32> to vector<4x128xf32>
    %51 = arith.addf %48, %50 : vector<4x128xf32>
    %c0_29 = arith.constant 0 : index
    %c0_30 = arith.constant 0 : index
    %52 = vector.load %arg2[%c0_29, %c0_30] : memref<4x64xf32, #tpu.memory_space<vmem>>, vector<4x64xf32>
    %c0_31 = arith.constant 0 : index
    %c0_32 = arith.constant 0 : index
    %53 = vector.load %arg9[%c0_31, %c0_32] : memref<64x128xf32, #tpu.memory_space<vmem>>, vector<64x128xf32>
    %cst_33 = arith.constant dense<0.000000e+00> : vector<4x128xf32>
    %54 = tpu.matmul %52, %53, %cst_33 {dimension_numbers = #tpu.dot_dimension_numbers<[1], [0], [0], [1], [0, 0, 1, 1], [], []>} : vector<4x64xf32>, vector<64x128xf32>, vector<4x128xf32> -> vector<4x128xf32>
    %c2 = arith.constant 2 : index
    %c0_34 = arith.constant 0 : index
    %55 = vector.load %arg10[%c2, %c0_34] : memref<3x128xf32, #tpu.memory_space<vmem>>, vector<1x128xf32>
    %56 = vector.broadcast %55 : vector<1x128xf32> to vector<4x128xf32>
    %57 = arith.addf %54, %56 : vector<4x128xf32>
    %c0_35 = arith.constant 0 : index
    %c0_36 = arith.constant 0 : index
    %c0_37 = arith.constant 0 : index
    %58 = vector.load %arg5[%c0_35, %c0_36, %c0_37] : memref<3x4x32xf32, #tpu.memory_space<vmem>>, vector<1x4x32xf32>
    %59 = vector.shape_cast %58 : vector<1x4x32xf32> to vector<4x32xf32>
    %60 = vector.extract_strided_slice %46 {offsets = [0, 0], sizes = [4, 32], strides = [1, 1]} : vector<4x128xf32> to vector<4x32xf32>
    %61 = arith.negf %60 : vector<4x32xf32>
    %62 = math.exp %61 : vector<4x32xf32>
    %cst_38 = arith.constant 1.000000e+00 : f32
    %63 = vector.broadcast %cst_38 : f32 to vector<4x32xf32>
    %64 = arith.addf %63, %62 : vector<4x32xf32>
    %65 = arith.divf %63, %64 : vector<4x32xf32>
    %66 = vector.extract_strided_slice %46 {offsets = [0, 32], sizes = [4, 32], strides = [1, 1]} : vector<4x128xf32> to vector<4x32xf32>
    %67 = arith.negf %66 : vector<4x32xf32>
    %68 = math.exp %67 : vector<4x32xf32>
    %cst_39 = arith.constant 1.000000e+00 : f32
    %69 = vector.broadcast %cst_39 : f32 to vector<4x32xf32>
    %70 = arith.addf %69, %68 : vector<4x32xf32>
    %71 = arith.divf %69, %70 : vector<4x32xf32>
    %72 = vector.extract_strided_slice %46 {offsets = [0, 64], sizes = [4, 32], strides = [1, 1]} : vector<4x128xf32> to vector<4x32xf32>
    %73 = math.tanh %72 : vector<4x32xf32>
    %74 = vector.extract_strided_slice %46 {offsets = [0, 96], sizes = [4, 32], strides = [1, 1]} : vector<4x128xf32> to vector<4x32xf32>
    %75 = arith.negf %74 : vector<4x32xf32>
    %76 = math.exp %75 : vector<4x32xf32>
    %cst_40 = arith.constant 1.000000e+00 : f32
    %77 = vector.broadcast %cst_40 : f32 to vector<4x32xf32>
    %78 = arith.addf %77, %76 : vector<4x32xf32>
    %79 = arith.divf %77, %78 : vector<4x32xf32>
    %80 = arith.mulf %71, %59 : vector<4x32xf32>
    %81 = arith.mulf %65, %73 : vector<4x32xf32>
    %82 = arith.addf %80, %81 : vector<4x32xf32>
    %83 = math.tanh %82 : vector<4x32xf32>
    %84 = arith.mulf %79, %83 : vector<4x32xf32>
    %c1_41 = arith.constant 1 : index
    %c0_42 = arith.constant 0 : index
    %c0_43 = arith.constant 0 : index
    %85 = vector.load %arg5[%c1_41, %c0_42, %c0_43] : memref<3x4x32xf32, #tpu.memory_space<vmem>>, vector<1x4x32xf32>
    %86 = vector.shape_cast %85 : vector<1x4x32xf32> to vector<4x32xf32>
    %87 = vector.extract_strided_slice %51 {offsets = [0, 0], sizes = [4, 32], strides = [1, 1]} : vector<4x128xf32> to vector<4x32xf32>
    %88 = arith.negf %87 : vector<4x32xf32>
    %89 = math.exp %88 : vector<4x32xf32>
    %cst_44 = arith.constant 1.000000e+00 : f32
    %90 = vector.broadcast %cst_44 : f32 to vector<4x32xf32>
    %91 = arith.addf %90, %89 : vector<4x32xf32>
    %92 = arith.divf %90, %91 : vector<4x32xf32>
    %93 = vector.extract_strided_slice %51 {offsets = [0, 32], sizes = [4, 32], strides = [1, 1]} : vector<4x128xf32> to vector<4x32xf32>
    %94 = arith.negf %93 : vector<4x32xf32>
    %95 = math.exp %94 : vector<4x32xf32>
    %cst_45 = arith.constant 1.000000e+00 : f32
    %96 = vector.broadcast %cst_45 : f32 to vector<4x32xf32>
    %97 = arith.addf %96, %95 : vector<4x32xf32>
    %98 = arith.divf %96, %97 : vector<4x32xf32>
    %99 = vector.extract_strided_slice %51 {offsets = [0, 64], sizes = [4, 32], strides = [1, 1]} : vector<4x128xf32> to vector<4x32xf32>
    %100 = math.tanh %99 : vector<4x32xf32>
    %101 = vector.extract_strided_slice %51 {offsets = [0, 96], sizes = [4, 32], strides = [1, 1]} : vector<4x128xf32> to vector<4x32xf32>
    %102 = arith.negf %101 : vector<4x32xf32>
    %103 = math.exp %102 : vector<4x32xf32>
    %cst_46 = arith.constant 1.000000e+00 : f32
    %104 = vector.broadcast %cst_46 : f32 to vector<4x32xf32>
    %105 = arith.addf %104, %103 : vector<4x32xf32>
    %106 = arith.divf %104, %105 : vector<4x32xf32>
    %107 = arith.mulf %98, %86 : vector<4x32xf32>
    %108 = arith.mulf %92, %100 : vector<4x32xf32>
    %109 = arith.addf %107, %108 : vector<4x32xf32>
    %110 = math.tanh %109 : vector<4x32xf32>
    %111 = arith.mulf %106, %110 : vector<4x32xf32>
    %c2_47 = arith.constant 2 : index
    %c0_48 = arith.constant 0 : index
    %c0_49 = arith.constant 0 : index
    %112 = vector.load %arg5[%c2_47, %c0_48, %c0_49] : memref<3x4x32xf32, #tpu.memory_space<vmem>>, vector<1x4x32xf32>
    %113 = vector.shape_cast %112 : vector<1x4x32xf32> to vector<4x32xf32>
    %114 = vector.extract_strided_slice %57 {offsets = [0, 0], sizes = [4, 32], strides = [1, 1]} : vector<4x128xf32> to vector<4x32xf32>
    %115 = arith.negf %114 : vector<4x32xf32>
    %116 = math.exp %115 : vector<4x32xf32>
    %cst_50 = arith.constant 1.000000e+00 : f32
    %117 = vector.broadcast %cst_50 : f32 to vector<4x32xf32>
    %118 = arith.addf %117, %116 : vector<4x32xf32>
    %119 = arith.divf %117, %118 : vector<4x32xf32>
    %120 = vector.extract_strided_slice %57 {offsets = [0, 32], sizes = [4, 32], strides = [1, 1]} : vector<4x128xf32> to vector<4x32xf32>
    %121 = arith.negf %120 : vector<4x32xf32>
    %122 = math.exp %121 : vector<4x32xf32>
    %cst_51 = arith.constant 1.000000e+00 : f32
    %123 = vector.broadcast %cst_51 : f32 to vector<4x32xf32>
    %124 = arith.addf %123, %122 : vector<4x32xf32>
    %125 = arith.divf %123, %124 : vector<4x32xf32>
    %126 = vector.extract_strided_slice %57 {offsets = [0, 64], sizes = [4, 32], strides = [1, 1]} : vector<4x128xf32> to vector<4x32xf32>
    %127 = math.tanh %126 : vector<4x32xf32>
    %128 = vector.extract_strided_slice %57 {offsets = [0, 96], sizes = [4, 32], strides = [1, 1]} : vector<4x128xf32> to vector<4x32xf32>
    %129 = arith.negf %128 : vector<4x32xf32>
    %130 = math.exp %129 : vector<4x32xf32>
    %cst_52 = arith.constant 1.000000e+00 : f32
    %131 = vector.broadcast %cst_52 : f32 to vector<4x32xf32>
    %132 = arith.addf %131, %130 : vector<4x32xf32>
    %133 = arith.divf %131, %132 : vector<4x32xf32>
    %134 = arith.mulf %125, %113 : vector<4x32xf32>
    %135 = arith.mulf %119, %127 : vector<4x32xf32>
    %136 = arith.addf %134, %135 : vector<4x32xf32>
    %137 = math.tanh %136 : vector<4x32xf32>
    %138 = arith.mulf %133, %137 : vector<4x32xf32>
    %139 = tpu.concatenate %84, %111, %138, %82, %109, %136 in 1 : vector<4x32xf32>, vector<4x32xf32>, vector<4x32xf32>, vector<4x32xf32>, vector<4x32xf32>, vector<4x32xf32> -> vector<4x192xf32>
    %c0_53 = arith.constant 0 : index
    %c0_54 = arith.constant 0 : index
    %140 = vector.load %arg12[%c0_53, %c0_54] : memref<4x192xf32, #tpu.memory_space<vmem>>, vector<4x192xf32>
    tpu.vector_store %arg12[%c0_53, %c0_54], %139 {strides = array<i32>} : memref<4x192xf32, #tpu.memory_space<vmem>>, vector<4x192xf32>,
    return
  }
}

</mosaic_0001>

<llo_original>
// kernel: tpu_custom_call.1
$region0: #{tpu_custom_call.1}
  #allocation0 [shape = 'u32[]', space=smem, size = 0x4, offset = 0x4, fixed_abs, tag = 'smem constant byte address 0x4 - core index']
  #allocation1 [shape = 'u32[72,128]{1,0:T(1,128)}', space=vmem, size = 0x9000, scoped, tag = 'internal scratch']
  #allocation2 [shape = 'f32[1]{0:T(128)S(6)}', space=smem, size = 0x200, scoped, tag = 'scoped memory for tpu_custom_call.1']
  %s0 = inlined_call_operand.vmem [shape: f32[4,64], index: 0, kind: input, shape index: {}]
  %s1 = inlined_call_operand.vmem [shape: f32[4,48], index: 1, kind: input, shape index: {}]
  %s2 = inlined_call_operand.vmem [shape: f32[4,64], index: 2, kind: input, shape index: {}]
  %s3 = inlined_call_operand.vmem [shape: f32[32,16], index: 3, kind: input, shape index: {}]
  %s4 = inlined_call_operand.vmem [shape: f32[4,8], index: 4, kind: input, shape index: {}]
  %s5 = inlined_call_operand.vmem [shape: f32[3,4,32], index: 5, kind: input, shape index: {}]
  %s6 = inlined_call_operand.vmem [shape: f32[64,32], index: 6, kind: input, shape index: {}]
  %s7 = inlined_call_operand.vmem [shape: f32[64,128], index: 7, kind: input, shape index: {}]
  %s8 = inlined_call_operand.hbm [shape: f32[64,128], index: 8, kind: input, shape index: {}]
  %s9 = inlined_call_operand.hbm [shape: f32[64,128], index: 9, kind: input, shape index: {}]
  %s10 = inlined_call_operand.vmem [shape: f32[3,128], index: 10, kind: input, shape index: {}]
  %s11 = inlined_call_operand.<no memory space> [shape: f32[1], index: 11, kind: input, shape index: {}]
  %s12 = inlined_call_operand.hbm [shape: f32[4,192], index: 12, kind: output, shape index: {}]
  %s13 = sld [smem:[#allocation0]]
  $region66: #{tpu_custom_call.1} parent=0
    _
  %s15 = ssub.s32 1, %s13
  %s16 = scalar_select 0, %s15, %s13
  %17 = sst [smem:[#allocation2]] %s11
  $region1: #{tpu_custom_call.1} parent=0
    #allocation3 [shape = 'u8[32768]{0}', space=vmem, size = 0x8000, scoped, tag = 'input window, operand 8, single buffered']
    #allocation4 [shape = 's32[1]{0}', space=sflag, size = 0x4, scoped, tag = 'scoped memory for tpu_custom_call.1']
    #allocation5 [shape = 's32[1]{0}', space=sflag, size = 0x4, scoped, tag = 'scoped memory for tpu_custom_call.1']
    #allocation6 [shape = 'u8[32768]{0}', space=vmem, size = 0x8000, scoped, tag = 'input window, operand 9, single buffered']
    #allocation7 [shape = 's32[1]{0}', space=sflag, size = 0x4, scoped, tag = 'scoped memory for tpu_custom_call.1']
    #allocation8 [shape = 'u8[4096]{0}', space=vmem, size = 0x1000, scoped, tag = 'output window, operand 0, single buffered']
    %18 = vsyncpa [#allocation4], 0
    %19 = vsyncpa [#allocation7], 0
    %20 = vsyncpa [#allocation5], 0
    // Predicated region
    $region2: #{tpu_custom_call.1} parent=1 // pred_check
      _
    $region3: #{tpu_custom_call.1} parent=1 // pred_check_branch
      %22 = sbr.rel (0) target = $region5
    $region4: #{tpu_custom_call.1} parent=1 // pred_region
      _
    $region5: #{tpu_custom_call.1} parent=1 // pred_fallthru
      _
    // Predicated region
    $region6: #{tpu_custom_call.1} parent=1 // pred_check
      _
    $region7: #{tpu_custom_call.1} parent=1 // pred_check_branch
      %24 = sbr.rel (0) target = $region9
    $region8: #{tpu_custom_call.1} parent=1 // pred_region
      _
    $region9: #{tpu_custom_call.1} parent=1 // pred_fallthru
      _
    // Predicated region
    $region10: #{tpu_custom_call.1} parent=1 // pred_check
      _
    $region11: #{tpu_custom_call.1} parent=1 // pred_check_branch
      %26 = sbr.rel (0) target = $region13
    $region12: #{tpu_custom_call.1} parent=1 // pred_region
      _
    $region13: #{tpu_custom_call.1} parent=1 // pred_fallthru
      _
    // Predicated region
    $region14: #{tpu_custom_call.1} parent=1 // pred_check
      _
    $region15: #{tpu_custom_call.1} parent=1 // pred_check_branch
      %28 = sbr.rel (0) target = $region17
    $region16: #{tpu_custom_call.1} parent=1 // pred_region
      _
    $region17: #{tpu_custom_call.1} parent=1 // pred_fallthru
      _
    // Predicated region
    $region18: #{tpu_custom_call.1} parent=1 // pred_check
      _
    $region19: #{tpu_custom_call.1} parent=1 // pred_check_branch
      %30 = sbr.rel (0) target = $region21
    $region20: #{tpu_custom_call.1} parent=1 // pred_region
      _
    $region21: #{tpu_custom_call.1} parent=1 // pred_fallthru
      _
    // Predicated region
    $region22: #{tpu_custom_call.1} parent=1 // pred_check
      _
    $region23: #{tpu_custom_call.1} parent=1 // pred_check_branch
      %32 = sbr.rel (0) target = $region25
    $region24: #{tpu_custom_call.1} parent=1 // pred_region
      _
    $region25: #{tpu_custom_call.1} parent=1 // pred_fallthru
      _
    // Predicated region
    $region26: #{tpu_custom_call.1} parent=1 // pred_check
      _
    $region27: #{tpu_custom_call.1} parent=1 // pred_check_branch
      %34 = sbr.rel (0) target = $region29
    $region28: #{tpu_custom_call.1} parent=1 // pred_region
      _
    $region29: #{tpu_custom_call.1} parent=1 // pred_fallthru
      _
    // Predicated region
    $region30: #{tpu_custom_call.1} parent=1 // pred_check
      _
    $region31: #{tpu_custom_call.1} parent=1 // pred_check_branch
      %36 = sbr.rel (0) target = $region33
    $region32: #{tpu_custom_call.1} parent=1 // pred_region
      _
    $region33: #{tpu_custom_call.1} parent=1 // pred_fallthru
      _
    // Predicated region
    $region34: #{tpu_custom_call.1} parent=1 // pred_check
      _
    $region35: #{tpu_custom_call.1} parent=1 // pred_check_branch
      %38 = sbr.rel (0) target = $region37
    $region36: #{tpu_custom_call.1} parent=1 // pred_region
      %40 = vsyncadd [#allocation4], 0
      %s41 = sshll.u32 %s8, 4
      %s42 = int_to_ptr.hbm [resolvable:$true] %s41
      %s43 = sshll.u32 [#allocation3], 4
      %s44 = int_to_ptr.vmem [resolvable:$true] %s43
      %49 = dma.hbm_to_vmem [thread:$0]  %s42, 1024, %s44, [#allocation4], 128, 128, 8
    $region37: #{tpu_custom_call.1} parent=1 // pred_fallthru
      _
    // Predicated region
    $region38: #{tpu_custom_call.1} parent=1 // pred_check
      _
    $region39: #{tpu_custom_call.1} parent=1 // pred_check_branch
      %51 = sbr.rel (0) target = $region41
    $region40: #{tpu_custom_call.1} parent=1 // pred_region
      %53 = vsyncadd [#allocation7], 0
      %s54 = sshll.u32 %s9, 4
      %s55 = int_to_ptr.hbm [resolvable:$true] %s54
      %s56 = sshll.u32 [#allocation6], 4
      %s57 = int_to_ptr.vmem [resolvable:$true] %s56
      %62 = dma.hbm_to_vmem [thread:$0]  %s55, 1024, %s57, [#allocation7], 128, 128, 8
    $region41: #{tpu_custom_call.1} parent=1 // pred_fallthru
      _
    // Predicated region
    $region42: #{tpu_custom_call.1} parent=1 // pred_check
      _
    $region43: #{tpu_custom_call.1} parent=1 // pred_check_branch
      %64 = sbr.rel (0) target = $region45
    $region44: #{tpu_custom_call.1} parent=1 // pred_region
      _
    $region45: #{tpu_custom_call.1} parent=1 // pred_fallthru
      _
    // Predicated region
    $region46: #{tpu_custom_call.1} parent=1 // pred_check
      _
    $region47: #{tpu_custom_call.1} parent=1 // pred_check_branch
      %66 = sbr.rel (0) target = $region49
    $region48: #{tpu_custom_call.1} parent=1 // pred_region
      _
    $region49: #{tpu_custom_call.1} parent=1 // pred_fallthru
      _
    // Predicated region
    $region50: #{tpu_custom_call.1} parent=1 // pred_check
      _
    $region51: #{tpu_custom_call.1} parent=1 // pred_check_branch
      %68 = sbr.rel (0) target = $region53
    $region52: #{tpu_custom_call.1} parent=1 // pred_region
      %70 = dma.done [#allocation4], 1024
    $region53: #{tpu_custom_call.1} parent=1 // pred_fallthru
      _
    // Predicated region
    $region54: #{tpu_custom_call.1} parent=1 // pred_check
      _
    $region55: #{tpu_custom_call.1} parent=1 // pred_check_branch
      %72 = sbr.rel (0) target = $region57
    $region56: #{tpu_custom_call.1} parent=1 // pred_region
      %74 = dma.done [#allocation7], 1024
    $region57: #{tpu_custom_call.1} parent=1 // pred_fallthru
      _
    %v75 = vld [vmem:[%s1] sm:$0xf]
    %v76 = vld [vmem:[%s6] sm:$0xff]
    %v77 = vld [vmem:[%s6 + $0x8] sm:$0xff]
    %v78 = vld [vmem:[%s6 + $0x10] sm:$0xff]
    %v79 = vld [vmem:[%s6 + $0x18] sm:$0xff]
    %v80 = vld [vmem:[%s6 + $0x20] sm:$0xff]
    %v81 = vld [vmem:[%s6 + $0x28] sm:$0xff]
    %v82 = vld [vmem:[%s6 + $0x30] sm:$0x1]
    %v83 = vld [vmem:[%s6 + $0x38] sm:$0x1]
    %v84 = vld [vmem:[%s3] sm:$0xff]
    %v85 = vld [vmem:[%s3 + $0x8] sm:$0xff]
    %v86 = vld [vmem:[%s3 + $0x10] sm:$0xff]
    %v87 = vld [vmem:[%s3 + $0x18] sm:$0xff]
    %vm88 = vcmask 130048
    %v90 = vsel %vm88, %v84, 0
    %v93 = vsel %vm88, %v85, 0
    %v96 = vsel %vm88, %v86, 0
    %v99 = vsel %vm88, %v87, 0
    %101 = vmatpush.msra.mxu0 0.0
    %102 = vmatpush.msra.mxu0 0.0
    %103 = vmatpush.msra.mxu0 0.0
    %104 = vmatpush.msra.mxu0 0.0
    %105 = vmatpush.msra.mxu0 0.0
    %106 = vmatpush.msra.mxu0 0.0
    %107 = vmatpush.msra.mxu0 0.0
    %108 = vmatpush.msra.mxu0 0.0
    %109 = vmatpush.msra.mxu0 0.0
    %110 = vmatpush.msra.mxu0 0.0
    %111 = vmatpush.msra.mxu0 0.0
    %112 = vmatpush.msra.mxu0 0.0
    %113 = vmatpush.msra.mxu0 0.0
    %114 = vmatpush.msra.mxu0 0.0
    %115 = vmatpush.msra.mxu0 %v77
    %116 = vmatpush.msra.mxu0 %v76
    %117 = vmatmul.f32.gmra.mxu0 %v90
    %v118 = vpop.f32.mrf.mxu0
    %v119 = vadd.f32 0.0, %v118
    %120 = vmatmul.f32.gmra.mxu0 %v93
    %v121 = vpop.f32.mrf.mxu0
    %v122 = vadd.f32 0.0, %v121
    %123 = vmatmul.f32.gmra.mxu0 %v96
    %v124 = vpop.f32.mrf.mxu0
    %v125 = vadd.f32 0.0, %v124
    %126 = vmatmul.f32.gmra.mxu0 %v99
    %v127 = vpop.f32.mrf.mxu0
    %v128 = vadd.f32 0.0, %v127
    %129 = vdwg.mxu0
    %v130 = vperm.slane %v82, 0
    %132 = vrot.lane.b32.xlu0 %v75, 112
    %v133 = vpop.permute.xlu0 %132
    %vm134 = vcmask 261120
    %v135 = vsel %vm134, %v133, 0
    %137 = vmatpush.msra.mxu0 0.0
    %138 = vmatpush.msra.mxu0 0.0
    %139 = vmatpush.msra.mxu0 0.0
    %140 = vmatpush.msra.mxu0 0.0
    %141 = vmatpush.msra.mxu0 0.0
    %142 = vmatpush.msra.mxu0 0.0
    %143 = vmatpush.msra.mxu0 0.0
    %144 = vmatpush.msra.mxu0 0.0
    %145 = vmatpush.msra.mxu0 0.0
    %146 = vmatpush.msra.mxu0 0.0
    %147 = vmatpush.msra.mxu0 0.0
    %148 = vmatpush.msra.mxu0 0.0
    %149 = vmatpush.msra.mxu0 %v81
    %150 = vmatpush.msra.mxu0 %v80
    %151 = vmatpush.msra.mxu0 %v79
    %152 = vmatpush.msra.mxu0 %v78
    %153 = vmatmul.f32.gmra.mxu0 %v135
    %v154 = vpop.f32.mrf.mxu0
    %v155 = vadd.f32 %v130, %v154
    %156 = vdwg.mxu0
    %v158 = vrot.slane %v155, 1
    %v159 = vrot.slane %v155, 2
    %v160 = vrot.slane %v155, 3
    %v161 = vperm.slane %v155, 0
    %v162 = vperm.slane %v158, 0
    %v163 = vperm.slane %v159, 0
    %v164 = vperm.slane %v160, 0
    %v169 = vadd.f32 %v119, %v161
    %v170 = vadd.f32 %v122, %v162
    %v171 = vadd.f32 %v125, %v163
    %v172 = vadd.f32 %v128, %v164
    %v173 = vtanh.pop %v169
    %v174 = vtanh.pop %v170
    %v175 = vtanh.pop %v171
    %v176 = vtanh.pop %v172
    %v177 = vperm.slane %v83, 0
    %v178 = vmul.f32 %v173, %v177
    %v179 = vmul.f32 %v174, %v177
    %v180 = vmul.f32 %v175, %v177
    %v181 = vmul.f32 %v176, %v177
    %v182 = vsel %vm134, %v178, 0.0
    %183 = vadd.xlane.f32.xlu0 %v182
    %v184 = vpop.xlane.xlu0 %183
    %v185 = vsel %vm134, %v179, 0.0
    %186 = vadd.xlane.f32.xlu0 %v185
    %v187 = vpop.xlane.xlu0 %186
    %v188 = vsel %vm134, %v180, 0.0
    %189 = vadd.xlane.f32.xlu0 %v188
    %v190 = vpop.xlane.xlu0 %189
    %v191 = vsel %vm134, %v181, 0.0
    %192 = vadd.xlane.f32.xlu0 %v191
    %v193 = vpop.xlane.xlu0 %192
    %s194 = sld [smem:[#allocation2]]
    %v195 = vstv %s194
    %v196 = vadd.f32 %v184, %v195
    %v197 = vadd.f32 %v187, %v195
    %v198 = vadd.f32 %v190, %v195
    %v199 = vadd.f32 %v193, %v195
    %v204 = vlaneseq
    %v205 = vand.u32 %v204, 127
    %v206 = vperm.slane %v196, %v205
    %v207 = vperm.slane %v197, %v205
    %v208 = vperm.slane %v198, %v205
    %v209 = vperm.slane %v199, %v205
    %vm210 = vcmask 1041409
    %v211 = vsel %vm210, %v207, %v206
    %vm212 = vcmask 1042434
    %v213 = vsel %vm212, %v208, %v211
    %vm214 = vcmask 1043459
    %v215 = vsel %vm214, %v209, %v213
    %vm217 = vcmask 60416
    %v218 = vsel %vm217, %v215, -inf
    %219 = vmax.xlane.f32.xlu0 %v218
    %v220 = vpop.xlane.xlu0 %219
    %v222 = vperm.slane %v220, 0
    %v223 = vperm.slane %v220, 1
    %v224 = vperm.slane %v220, 2
    %v225 = vperm.slane %v220, 3
    %v230 = vsub.f32 %v196, %v222
    %v231 = vsub.f32 %v197, %v223
    %v232 = vsub.f32 %v198, %v224
    %v233 = vsub.f32 %v199, %v225
    %v234 = vmul.f32 %v230, 1.442695
    %v235 = vpow.pop %v234
    %v236 = vmul.f32 %v231, 1.442695
    %v237 = vpow.pop %v236
    %v238 = vmul.f32 %v232, 1.442695
    %v239 = vpow.pop %v238
    %v240 = vmul.f32 %v233, 1.442695
    %v241 = vpow.pop %v240
    %v242 = vld [vmem:[%s4] sm:$0xf]
    %v244 = vperm.slane %v242, 0
    %v245 = vlaneseq
    %v246 = vshrl.u32 %v245, 7
    %248 = vset.pattern.permute.xlu0 %v246
    %249 = vperm.xlu0 %248, %v244
    %v250 = vpop.permute.xlu0 %249
    %v251 = vperm.slane %v242, 1
    %v252 = vlaneseq
    %v253 = vshrl.u32 %v252, 7
    %255 = vset.pattern.permute.xlu0 %v253
    %256 = vperm.xlu0 %255, %v251
    %v257 = vpop.permute.xlu0 %256
    %v258 = vperm.slane %v242, 2
    %v259 = vlaneseq
    %v260 = vshrl.u32 %v259, 7
    %262 = vset.pattern.permute.xlu0 %v260
    %263 = vperm.xlu0 %262, %v258
    %v264 = vpop.permute.xlu0 %263
    %v265 = vperm.slane %v242, 3
    %v266 = vlaneseq
    %v267 = vshrl.u32 %v266, 7
    %269 = vset.pattern.permute.xlu0 %v267
    %270 = vperm.xlu0 %269, %v265
    %v271 = vpop.permute.xlu0 %270
    %v276 = vmul.f32 %v235, %v250
    %v277 = vmul.f32 %v237, %v257
    %v278 = vmul.f32 %v239, %v264
    %v279 = vmul.f32 %v241, %v271
    %284 = vset.pattern.permute.xlu0 0
    %285 = vperm.xlu0 %284, %v276
    %v286 = vpop.permute.xlu0 %285
    %287 = vset.pattern.permute.xlu0 0
    %288 = vperm.xlu0 %287, %v277
    %v289 = vpop.permute.xlu0 %288
    %290 = vset.pattern.permute.xlu0 0
    %291 = vperm.xlu0 %290, %v278
    %v292 = vpop.permute.xlu0 %291
    %293 = vset.pattern.permute.xlu0 0
    %294 = vperm.xlu0 %293, %v279
    %v295 = vpop.permute.xlu0 %294
    %v296 = vperm.slane %v286, %v205
    %v297 = vperm.slane %v289, %v205
    %v298 = vperm.slane %v292, %v205
    %v299 = vperm.slane %v295, %v205
    %v300 = vsel %vm210, %v297, %v296
    %v301 = vsel %vm212, %v298, %v300
    %v302 = vsel %vm214, %v299, %v301
    %v304 = vsel %vm217, %v302, 0.0
    %305 = vadd.xlane.f32.xlu0 %v304
    %v306 = vpop.xlane.xlu0 %305
    %v307 = vrcp.pop %v306
    %v309 = vperm.slane %v307, 0
    %v310 = vperm.slane %v307, 1
    %v311 = vperm.slane %v307, 2
    %v312 = vperm.slane %v307, 3
    %v317 = vmul.f32 %v276, %v309
    %v318 = vmul.f32 %v277, %v310
    %v319 = vmul.f32 %v278, %v311
    %v320 = vmul.f32 %v279, %v312
    %322 = vset.pattern.permute.xlu0 0
    %323 = vperm.xlu0 %322, %v317
    %v324 = vpop.permute.xlu0 %323
    %327 = vset.pattern.permute.xlu0 0
    %328 = vperm.xlu0 %327, %v318
    %v329 = vpop.permute.xlu0 %328
    %332 = vset.pattern.permute.xlu0 0
    %333 = vperm.xlu0 %332, %v319
    %v334 = vpop.permute.xlu0 %333
    %337 = vset.pattern.permute.xlu0 0
    %338 = vperm.xlu0 %337, %v320
    %v339 = vpop.permute.xlu0 %338
    %v341 = vmul.f32 %v324, %v84
    %v342 = vmul.f32 %v329, %v85
    %v343 = vmul.f32 %v334, %v86
    %v344 = vmul.f32 %v339, %v87
    %v345 = vsel %vm88, %v341, 0.0
    %v346 = vrot.slane %v345, 4
    %v347 = vadd.f32 %v345, %v346
    %v348 = vrot.slane %v347, 2
    %v349 = vadd.f32 %v347, %v348
    %v350 = vrot.slane %v349, 1
    %v351 = vadd.f32 %v349, %v350
    %v352 = vsel %vm88, %v342, 0.0
    %v353 = vrot.slane %v352, 4
    %v354 = vadd.f32 %v352, %v353
    %v355 = vrot.slane %v354, 2
    %v356 = vadd.f32 %v354, %v355
    %v357 = vrot.slane %v356, 1
    %v358 = vadd.f32 %v356, %v357
    %v359 = vsel %vm88, %v343, 0.0
    %v360 = vrot.slane %v359, 4
    %v361 = vadd.f32 %v359, %v360
    %v362 = vrot.slane %v361, 2
    %v363 = vadd.f32 %v361, %v362
    %v364 = vrot.slane %v363, 1
    %v365 = vadd.f32 %v363, %v364
    %v366 = vsel %vm88, %v344, 0.0
    %v367 = vrot.slane %v366, 4
    %v368 = vadd.f32 %v366, %v367
    %v369 = vrot.slane %v368, 2
    %v370 = vadd.f32 %v368, %v369
    %v371 = vrot.slane %v370, 1
    %v372 = vadd.f32 %v370, %v371
    %v377 = vsel %vm210, %v358, %v351
    %v378 = vsel %vm212, %v365, %v377
    %v379 = vsel %vm214, %v372, %v378
    %380 = vrot.lane.b32.xlu0 %v379, 48
    %v381 = vpop.permute.xlu0 %380
    %vm383 = vcmask 392192
    %v384 = vsel %vm383, %v75, %v381
    %v385 = vld [vmem:[%s0] sm:$0xf]
    %v386 = vld [vmem:[%s7] sm:$0xff]
    %v387 = vld [vmem:[%s7 + $0x8] sm:$0xff]
    %v388 = vld [vmem:[%s7 + $0x10] sm:$0xff]
    %v389 = vld [vmem:[%s7 + $0x18] sm:$0xff]
    %v390 = vld [vmem:[%s7 + $0x20] sm:$0xff]
    %v391 = vld [vmem:[%s7 + $0x28] sm:$0xff]
    %v392 = vld [vmem:[%s7 + $0x30] sm:$0xff]
    %v393 = vld [vmem:[%s7 + $0x38] sm:$0xff]
    %v394 = vld [vmem:[%s10] sm:$0x1]
    %v395 = vperm.slane %v394, 0
    %vm396 = vcmask 523264
    %v398 = vsel %vm396, %v385, 0
    %400 = vmatpush.msra.mxu0 0.0
    %401 = vmatpush.msra.mxu0 0.0
    %402 = vmatpush.msra.mxu0 0.0
    %403 = vmatpush.msra.mxu0 0.0
    %404 = vmatpush.msra.mxu0 0.0
    %405 = vmatpush.msra.mxu0 0.0
    %406 = vmatpush.msra.mxu0 0.0
    %407 = vmatpush.msra.mxu0 0.0
    %408 = vmatpush.msra.mxu0 %v393
    %409 = vmatpush.msra.mxu0 %v392
    %410 = vmatpush.msra.mxu0 %v391
    %411 = vmatpush.msra.mxu0 %v390
    %412 = vmatpush.msra.mxu0 %v389
    %413 = vmatpush.msra.mxu0 %v388
    %414 = vmatpush.msra.mxu0 %v387
    %415 = vmatpush.msra.mxu0 %v386
    %416 = vmatmul.f32.gmra.mxu0 %v398
    %v417 = vpop.f32.mrf.mxu0
    %v418 = vadd.f32 %v395, %v417
    %419 = vdwg.mxu0
    %v420 = vld [vmem:[#allocation3] sm:$0xff]
    %v421 = vld [vmem:[#allocation3 + $0x8] sm:$0xff]
    %v422 = vld [vmem:[#allocation3 + $0x10] sm:$0xff]
    %v423 = vld [vmem:[#allocation3 + $0x18] sm:$0xff]
    %v424 = vld [vmem:[#allocation3 + $0x20] sm:$0xff]
    %v425 = vld [vmem:[#allocation3 + $0x28] sm:$0xff]
    %v426 = vld [vmem:[#allocation3 + $0x30] sm:$0xff]
    %v427 = vld [vmem:[#allocation3 + $0x38] sm:$0xff]
    %v428 = vld [vmem:[%s10 + $0x1] sm:$0x1]
    %v429 = vperm.slane %v428, 0
    %v431 = vsel %vm396, %v384, 0
    %433 = vmatpush.msra.mxu0 0.0
    %434 = vmatpush.msra.mxu0 0.0
    %435 = vmatpush.msra.mxu0 0.0
    %436 = vmatpush.msra.mxu0 0.0
    %437 = vmatpush.msra.mxu0 0.0
    %438 = vmatpush.msra.mxu0 0.0
    %439 = vmatpush.msra.mxu0 0.0
    %440 = vmatpush.msra.mxu0 0.0
    %441 = vmatpush.msra.mxu0 %v427
    %442 = vmatpush.msra.mxu0 %v426
    %443 = vmatpush.msra.mxu0 %v425
    %444 = vmatpush.msra.mxu0 %v424
    %445 = vmatpush.msra.mxu0 %v423
    %446 = vmatpush.msra.mxu0 %v422
    %447 = vmatpush.msra.mxu0 %v421
    %448 = vmatpush.msra.mxu0 %v420
    %449 = vmatmul.f32.gmra.mxu0 %v431
    %v450 = vpop.f32.mrf.mxu0
    %v451 = vadd.f32 %v429, %v450
    %452 = vdwg.mxu0
    %v453 = vld [vmem:[%s2] sm:$0xf]
    %v454 = vld [vmem:[#allocation6] sm:$0xff]
    %v455 = vld [vmem:[#allocation6 + $0x8] sm:$0xff]
    %v456 = vld [vmem:[#allocation6 + $0x10] sm:$0xff]
    %v457 = vld [vmem:[#allocation6 + $0x18] sm:$0xff]
    %v458 = vld [vmem:[#allocation6 + $0x20] sm:$0xff]
    %v459 = vld [vmem:[#allocation6 + $0x28] sm:$0xff]
    %v460 = vld [vmem:[#allocation6 + $0x30] sm:$0xff]
    %v461 = vld [vmem:[#allocation6 + $0x38] sm:$0xff]
    %v462 = vld [vmem:[%s10 + $0x2] sm:$0x1]
    %v463 = vperm.slane %v462, 0
    %v465 = vsel %vm396, %v453, 0
    %467 = vmatpush.msra.mxu0 0.0
    %468 = vmatpush.msra.mxu0 0.0
    %469 = vmatpush.msra.mxu0 0.0
    %470 = vmatpush.msra.mxu0 0.0
    %471 = vmatpush.msra.mxu0 0.0
    %472 = vmatpush.msra.mxu0 0.0
    %473 = vmatpush.msra.mxu0 0.0
    %474 = vmatpush.msra.mxu0 0.0
    %475 = vmatpush.msra.mxu0 %v461
    %476 = vmatpush.msra.mxu0 %v460
    %477 = vmatpush.msra.mxu0 %v459
    %478 = vmatpush.msra.mxu0 %v458
    %479 = vmatpush.msra.mxu0 %v457
    %480 = vmatpush.msra.mxu0 %v456
    %481 = vmatpush.msra.mxu0 %v455
    %482 = vmatpush.msra.mxu0 %v454
    %483 = vmatmul.f32.gmra.mxu0 %v465
    %v484 = vpop.f32.mrf.mxu0
    %v485 = vadd.f32 %v463, %v484
    %486 = vdwg.mxu0
    %v487 = vld [vmem:[%s5] sm:$0xf]
    %v488 = vxor.u32 %v418, 2147483648
    %v489 = vmul.f32 %v488, 1.442695
    %v490 = vpow.pop %v489
    %v491 = vadd.f32 %v490, 1.0
    %v492 = vrcp.pop %v491
    %v493 = vmul.f32 %v491, %v492
    %v494 = vsub.f32 1.0, %v493
    %v495 = vmul.f32 %v492, %v494
    %v496 = vadd.f32 %v492, %v495
    %vm497 = vweird.f32 %v491
    %vm498 = vweird.f32 %v492
    %vm499 = vmor %vm497, %vm498
    %v500 = vsel %vm499, %v492, %v496
    %v501 = vand.u32 2147483647, %v491
    %vm502 = vcmp.eq.f32.partialorder %v501, 8.507059e+37
    %v503 = vand.u32 %v491, 2147483648
    %v504 = vor.u32 1.1754944e-38, %v503
    %v505 = vsel %vm502, %v504, %v500
    %v506 = vmul.f32 1.0, %v505
    %v507 = vtanh.pop %v418
    %509 = vrot.lane.b32.xlu0 %v487, 32
    %v510 = vpop.permute.xlu0 %509
    %v512 = vmul.f32 %v506, %v510
    %514 = vrot.lane.b32.xlu0 %v507, 64
    %v515 = vpop.permute.xlu0 %514
    %v517 = vmul.f32 %v506, %v515
    %519 = vrot.lane.b32.xlu0 %v517, 32
    %v520 = vpop.permute.xlu0 %519
    %v522 = vadd.f32 %v512, %v520
    %v523 = vtanh.pop %v522
    %525 = vrot.lane.b32.xlu0 %v523, 64
    %v526 = vpop.permute.xlu0 %525
    %v528 = vmul.f32 %v506, %v526
    %s529 = scalar_lea.vmem %s5, 4
    %v530 = vld [vmem:[%s529] sm:$0xf]
    %v531 = vxor.u32 %v451, 2147483648
    %v532 = vmul.f32 %v531, 1.442695
    %v533 = vpow.pop %v532
    %v534 = vadd.f32 %v533, 1.0
    %v535 = vrcp.pop %v534
    %v536 = vmul.f32 %v534, %v535
    %v537 = vsub.f32 1.0, %v536
    %v538 = vmul.f32 %v535, %v537
    %v539 = vadd.f32 %v535, %v538
    %vm540 = vweird.f32 %v534
    %vm541 = vweird.f32 %v535
    %vm542 = vmor %vm540, %vm541
    %v543 = vsel %vm542, %v535, %v539
    %v544 = vand.u32 2147483647, %v534
    %vm545 = vcmp.eq.f32.partialorder %v544, 8.507059e+37
    %v546 = vand.u32 %v534, 2147483648
    %v547 = vor.u32 1.1754944e-38, %v546
    %v548 = vsel %vm545, %v547, %v543
    %v549 = vmul.f32 1.0, %v548
    %v550 = vtanh.pop %v451
    %552 = vrot.lane.b32.xlu0 %v530, 32
    %v553 = vpop.permute.xlu0 %552
    %v555 = vmul.f32 %v549, %v553
    %557 = vrot.lane.b32.xlu0 %v550, 64
    %v558 = vpop.permute.xlu0 %557
    %v560 = vmul.f32 %v549, %v558
    %562 = vrot.lane.b32.xlu0 %v560, 32
    %v563 = vpop.permute.xlu0 %562
    %v565 = vadd.f32 %v555, %v563
    %v566 = vtanh.pop %v565
    %568 = vrot.lane.b32.xlu0 %v566, 64
    %v569 = vpop.permute.xlu0 %568
    %v571 = vmul.f32 %v549, %v569
    %s572 = scalar_lea.vmem %s5, 8
    %v573 = vld [vmem:[%s572] sm:$0xf]
    %v574 = vxor.u32 %v485, 2147483648
    %v575 = vmul.f32 %v574, 1.442695
    %v576 = vpow.pop %v575
    %v577 = vadd.f32 %v576, 1.0
    %v578 = vrcp.pop %v577
    %v579 = vmul.f32 %v577, %v578
    %v580 = vsub.f32 1.0, %v579
    %v581 = vmul.f32 %v578, %v580
    %v582 = vadd.f32 %v578, %v581
    %vm583 = vweird.f32 %v577
    %vm584 = vweird.f32 %v578
    %vm585 = vmor %vm583, %vm584
    %v586 = vsel %vm585, %v578, %v582
    %v587 = vand.u32 2147483647, %v577
    %vm588 = vcmp.eq.f32.partialorder %v587, 8.507059e+37
    %v589 = vand.u32 %v577, 2147483648
    %v590 = vor.u32 1.1754944e-38, %v589
    %v591 = vsel %vm588, %v590, %v586
    %v592 = vmul.f32 1.0, %v591
    %v593 = vtanh.pop %v485
    %595 = vrot.lane.b32.xlu0 %v573, 32
    %v596 = vpop.permute.xlu0 %595
    %v598 = vmul.f32 %v592, %v596
    %600 = vrot.lane.b32.xlu0 %v593, 64
    %v601 = vpop.permute.xlu0 %600
    %v603 = vmul.f32 %v592, %v601
    %605 = vrot.lane.b32.xlu0 %v603, 32
    %v606 = vpop.permute.xlu0 %605
    %v608 = vadd.f32 %v598, %v606
    %v609 = vtanh.pop %v608
    %611 = vrot.lane.b32.xlu0 %v609, 64
    %v612 = vpop.permute.xlu0 %611
    %v614 = vmul.f32 %v592, %v612
    %616 = vrot.lane.b32.xlu0 %v528, 32
    %v617 = vpop.permute.xlu0 %616
    %620 = vrot.lane.b32.xlu0 %v571, 64
    %v621 = vpop.permute.xlu0 %620
    %624 = vrot.lane.b32.xlu0 %v614, 96
    %v625 = vpop.permute.xlu0 %624
    %628 = vrot.lane.b32.xlu0 %v522, 64
    %v629 = vpop.permute.xlu0 %628
    %632 = vrot.lane.b32.xlu0 %v565, 96
    %v633 = vpop.permute.xlu0 %632
    %v635 = vsel %vm134, %v617, %v621
    %v636 = vsel %vm396, %v635, %v625
    %vm637 = vcmask 785408
    %v638 = vsel %vm637, %v636, %v629
    %v639 = vsel %vm134, %v633, %v608
    %v642 = vrot.slane %v639, 4
    %vm643 = vcmask 1043456
    %v644 = vsel %vm643, %v638, %v642
    %vm646 = vcmask 523268
    %vm647 = vmor %vm646, %vm643
    %648 = vst.msk [vmem:[#allocation8] sm:$0xff] %vm647, %v644
    // Predicated region
    $region58: #{tpu_custom_call.1} parent=1 // pred_check
      _
    $region59: #{tpu_custom_call.1} parent=1 // pred_check_branch
      %650 = sbr.rel (0) target = $region61
    $region60: #{tpu_custom_call.1} parent=1 // pred_region
      %652 = vsyncadd [#allocation5], 0
      %s654 = sshll.u32 [#allocation8], 4
      %s655 = int_to_ptr.vmem [resolvable:$true] %s654
      %s656 = sshll.u32 %s12, 4
      %s657 = int_to_ptr.hbm [resolvable:$true] %s656
      %659 = dma.vmem_to_hbm [thread:$0]  %s655, 128, %s657, [#allocation5]
    $region61: #{tpu_custom_call.1} parent=1 // pred_fallthru
      _
    // Predicated region
    $region62: #{tpu_custom_call.1} parent=1 // pred_check
      _
    $region63: #{tpu_custom_call.1} parent=1 // pred_check_branch
      %661 = sbr.rel (0) target = $region65
    $region64: #{tpu_custom_call.1} parent=1 // pred_region
      %663 = dma.done [#allocation5], 128
    $region65: #{tpu_custom_call.1} parent=1 // pred_fallthru
      _
    %664 = vsyncpa [#allocation4], 1
    %665 = vsyncpa [#allocation7], 1
    %666 = vsyncpa [#allocation5], 1

</llo_original>
